<compile_context>
chip_gen: v6e
topology: v6e:2x2x1
jax: 0.10.0
libtpu: 0.0.40
codegen_flags: <defaults>
</compile_context>

<pallas_src>
import jax
import jax.numpy as jnp
from jax.experimental import pallas as pl
from jax.experimental.pallas import tpu as pltpu

OUT_PAD = 8  # output rows padded to one sublane group (real Q-values live in rows 0..1)


def qnet_kernel(sT_ref, w1t_ref, b1t_ref, w2tp_ref, b2tp_ref, oT_ref):
    sT = sT_ref[...]                                   # (4, TB)   f32
    w1t = w1t_ref[...]                                 # (H, 4)    f32
    hdim = w1t.shape[0]
    tb = sT.shape[1]

    # Layer 1 (transposed, VPU): h^T = b1^T + sum_k w1^T[:, k] * s^T[k, :]
    # K = 4, statically unrolled; s^T[k:k+1, :] is a cheap sublane-row read.
    hT = jnp.broadcast_to(b1t_ref[...], (hdim, tb))    # bias folded into the accumulator
    for k in range(sT.shape[0]):                       # K = 4 at trace time
        hT = hT + w1t[:, k:k + 1] * sT[k:k + 1, :]     # (H,1) * (1,TB) broadcast FMA
    hT = jnp.maximum(hT, 0.0)                          # ReLU

    # Layer 2 (MXU, transposed): (8, H) @ (H, TB) -> (8, TB); padded rows 2..7 are zero.
    oT = jnp.dot(w2tp_ref[...], hT, preferred_element_type=jnp.float32)
    oT_ref[...] = oT + b2tp_ref[...]                   # narrow, lane-dense store


def prepare_qnet_params(w1, b1, w2, b2):
    """One-time repack of natural-layout params into the kernel's transposed/padded layout.

    w1: (4, H), b1: (1, H), w2: (H, 2), b2: (1, 2)  ->  (w1t, b1t, w2tp, b2tp)
    Hoisted out of the per-call path so no padding/transpose ops run per forward.
    """
    in_dim, hdim = w1.shape
    out_dim = w2.shape[1]
    w1t = jnp.asarray(w1, jnp.float32).T                                    # (H, 4)
    b1t = jnp.asarray(b1, jnp.float32).reshape(hdim, 1)                     # (H, 1)
    w2tp = jnp.zeros((OUT_PAD, hdim), jnp.float32).at[:out_dim, :].set(
        jnp.asarray(w2, jnp.float32).T)                                     # (8, H)
    b2tp = jnp.zeros((OUT_PAD, 1), jnp.float32).at[:out_dim, :].set(
        jnp.asarray(b2, jnp.float32).reshape(out_dim, 1))                   # (8, 1)
    return w1t, b1t, w2tp, b2tp


def _default_num_tiles():
    # v7x has 2 TensorCores/chip -> a parallel grid of exactly 2 uses both.
    # v5e/v6e have 1 TC -> a single big tile avoids per-grid-step overhead.
    try:
        kind = jax.devices()[0].device_kind.lower()
    except Exception:
        kind = ""
    return 2 if "v7" in kind else 1


def qnet_forward(s, w1t, b1t, w2tp, b2tp, *, num_tiles=None, out_dim=2):
    """s: (B, 4) f32; params from prepare_qnet_params  ->  (B, out_dim) f32."""
    B, in_dim = s.shape
    hdim = w1t.shape[0]

    if num_tiles is None:
        num_tiles = _default_num_tiles()

    # Lane dim of each block must be a multiple of 128 for dense, unmasked stores.
    tb = max(128, ((pl.cdiv(B, num_tiles) + 127) // 128) * 128)
    Bp = tb * num_tiles

    # Transposed activation stream: contiguous DMA runs, no per-row striding.
    sT = s.T                                            # (4, B)
    if Bp != B:
        sT = jnp.zeros((in_dim, Bp), s.dtype).at[:, :B].set(sT)

    # Weights use constant index_maps -> VMEM-resident across all grid steps
    # (Pallas elides their re-DMA, so no explicit single-buffering is needed).
    outT = pl.pallas_call(
        qnet_kernel,
        out_shape=jax.ShapeDtypeStruct((OUT_PAD, Bp), jnp.float32),
        grid=(num_tiles,),
        in_specs=[
            pl.BlockSpec((in_dim, tb), lambda i: (0, i)),       # s^T: streamed per tile
            pl.BlockSpec((hdim, in_dim), lambda i: (0, 0)),     # W1^T: resident
            pl.BlockSpec((hdim, 1), lambda i: (0, 0)),          # b1^T: resident
            pl.BlockSpec((OUT_PAD, hdim), lambda i: (0, 0)),    # W2^T (row-padded): resident
            pl.BlockSpec((OUT_PAD, 1), lambda i: (0, 0)),       # b2^T (row-padded): resident
        ],
        out_specs=pl.BlockSpec((OUT_PAD, tb), lambda i: (0, i)),
        compiler_params=pltpu.CompilerParams(
            dimension_semantics=("parallel",),                  # shards tiles across v7x TCs
        ),
    )(sT, w1t, b1t, w2tp, b2tp)

    # Real Q-values live in rows [0, out_dim); drop batch padding and transpose back.
    return outT[:out_dim, :B].T


def qnet_reference(s, w1, b1, w2, b2):
    h = jnp.maximum(s @ w1 + b1, 0.0)
    return h @ w2 + b2


if __name__ == "__main__":
    hidden_dim = 64
    in_dim, out_dim = 4, 2
    batch = 256  # a stack of CartPole-style states; multiple of 128 keeps stores dense

    key = jax.random.PRNGKey(0)
    k_s, k_w1, k_b1, k_w2, k_b2 = jax.random.split(key, 5)

    # Deterministic init mimicking PyTorch Linear's U(-1/sqrt(fan_in), 1/sqrt(fan_in)).
    lim1 = 1.0 / jnp.sqrt(float(in_dim))
    lim2 = 1.0 / jnp.sqrt(float(hidden_dim))
    w1 = jax.random.uniform(k_w1, (in_dim, hidden_dim), jnp.float32, -lim1, lim1)
    b1 = jax.random.uniform(k_b1, (1, hidden_dim), jnp.float32, -lim1, lim1)
    w2 = jax.random.uniform(k_w2, (hidden_dim, out_dim), jnp.float32, -lim2, lim2)
    b2 = jax.random.uniform(k_b2, (1, out_dim), jnp.float32, -lim2, lim2)

    # Input state batch: (batch, 4) observations.
    s = jax.random.normal(k_s, (batch, in_dim), jnp.float32)

    # One-time weight repacking, hoisted out of the per-call path.
    params = jax.block_until_ready(prepare_qnet_params(w1, b1, w2, b2))

    fwd = jax.jit(qnet_forward)
    out = jax.block_until_ready(fwd(s, *params))

    ref = qnet_reference(s, w1, b1, w2, b2)
    assert out.shape == (batch, out_dim)
    assert jnp.allclose(out, ref, atol=1e-5, rtol=1e-5), "mismatch vs reference"

    print("KERNEL_OK")
</pallas_src>

<mosaic_0001>
module attributes {stable_mosaic.version = 11 : i64} {
  func.func @qnet_kernel(%arg0: i32, %arg1: memref<4x256xf32, #tpu.memory_space<vmem>>, %arg2: memref<64x4xf32, #tpu.memory_space<vmem>>, %arg3: memref<64x1xf32, #tpu.memory_space<vmem>>, %arg4: memref<8x64xf32, #tpu.memory_space<vmem>>, %arg5: memref<8x1xf32, #tpu.memory_space<vmem>>, %arg6: memref<8x256xf32, #tpu.memory_space<vmem>>) attributes {dimension_semantics = [#tpu.dimension_semantics<parallel>], iteration_bounds = array<i64: 1>, scalar_prefetch = 0 : i64, scratch_operands = 0 : i64, tpu.core_type = #tpu.core_type<tc>, window_params = [{transform_indices = @transform_0, window_bounds = array<i64: 4, 256>}, {pipeline_mode = #tpu.pipeline_mode<synchronous>, transform_indices = @transform_1, window_bounds = array<i64: 64, 4>}, {pipeline_mode = #tpu.pipeline_mode<synchronous>, transform_indices = @transform_2, window_bounds = array<i64: 64, 1>}, {pipeline_mode = #tpu.pipeline_mode<synchronous>, transform_indices = @transform_3, window_bounds = array<i64: 8, 64>}, {pipeline_mode = #tpu.pipeline_mode<synchronous>, transform_indices = @transform_4, window_bounds = array<i64: 8, 1>}, {transform_indices = @transform_5, window_bounds = array<i64: 8, 256>}]} {
    %c0 = arith.constant 0 : index
    %c0_0 = arith.constant 0 : index
    %0 = vector.load %arg1[%c0, %c0_0] : memref<4x256xf32, #tpu.memory_space<vmem>>, vector<4x256xf32>
    %c0_1 = arith.constant 0 : index
    %c0_2 = arith.constant 0 : index
    %1 = vector.load %arg2[%c0_1, %c0_2] : memref<64x4xf32, #tpu.memory_space<vmem>>, vector<64x4xf32>
    %c0_3 = arith.constant 0 : index
    %c0_4 = arith.constant 0 : index
    %2 = vector.load %arg3[%c0_3, %c0_4] : memref<64x1xf32, #tpu.memory_space<vmem>>, vector<64x1xf32>
    %3 = vector.shape_cast %2 : vector<64x1xf32> to vector<64x1xf32>
    %4 = vector.broadcast %3 : vector<64x1xf32> to vector<64x256xf32>
    %5 = vector.extract_strided_slice %1 {offsets = [0, 0], sizes = [64, 1], strides = [1, 1]} : vector<64x4xf32> to vector<64x1xf32>
    %6 = vector.extract_strided_slice %0 {offsets = [0, 0], sizes = [1, 256], strides = [1, 1]} : vector<4x256xf32> to vector<1x256xf32>
    %7 = vector.broadcast %5 : vector<64x1xf32> to vector<64x256xf32>
    %8 = vector.broadcast %6 : vector<1x256xf32> to vector<64x256xf32>
    %9 = arith.mulf %7, %8 : vector<64x256xf32>
    %10 = arith.addf %4, %9 : vector<64x256xf32>
    %11 = vector.extract_strided_slice %1 {offsets = [0, 1], sizes = [64, 1], strides = [1, 1]} : vector<64x4xf32> to vector<64x1xf32>
    %12 = vector.extract_strided_slice %0 {offsets = [1, 0], sizes = [1, 256], strides = [1, 1]} : vector<4x256xf32> to vector<1x256xf32>
    %13 = vector.broadcast %11 : vector<64x1xf32> to vector<64x256xf32>
    %14 = vector.broadcast %12 : vector<1x256xf32> to vector<64x256xf32>
    %15 = arith.mulf %13, %14 : vector<64x256xf32>
    %16 = arith.addf %10, %15 : vector<64x256xf32>
    %17 = vector.extract_strided_slice %1 {offsets = [0, 2], sizes = [64, 1], strides = [1, 1]} : vector<64x4xf32> to vector<64x1xf32>
    %18 = vector.extract_strided_slice %0 {offsets = [2, 0], sizes = [1, 256], strides = [1, 1]} : vector<4x256xf32> to vector<1x256xf32>
    %19 = vector.broadcast %17 : vector<64x1xf32> to vector<64x256xf32>
    %20 = vector.broadcast %18 : vector<1x256xf32> to vector<64x256xf32>
    %21 = arith.mulf %19, %20 : vector<64x256xf32>
    %22 = arith.addf %16, %21 : vector<64x256xf32>
    %23 = vector.extract_strided_slice %1 {offsets = [0, 3], sizes = [64, 1], strides = [1, 1]} : vector<64x4xf32> to vector<64x1xf32>
    %24 = vector.extract_strided_slice %0 {offsets = [3, 0], sizes = [1, 256], strides = [1, 1]} : vector<4x256xf32> to vector<1x256xf32>
    %25 = vector.broadcast %23 : vector<64x1xf32> to vector<64x256xf32>
    %26 = vector.broadcast %24 : vector<1x256xf32> to vector<64x256xf32>
    %27 = arith.mulf %25, %26 : vector<64x256xf32>
    %28 = arith.addf %22, %27 : vector<64x256xf32>
    %cst = arith.constant 0.000000e+00 : f32
    %29 = vector.broadcast %cst : f32 to vector<64x256xf32>
    %30 = arith.maximumf %28, %29 : vector<64x256xf32>
    %c0_5 = arith.constant 0 : index
    %c0_6 = arith.constant 0 : index
    %31 = vector.load %arg4[%c0_5, %c0_6] : memref<8x64xf32, #tpu.memory_space<vmem>>, vector<8x64xf32>
    %cst_7 = arith.constant dense<0.000000e+00> : vector<8x256xf32>
    %32 = tpu.matmul %31, %30, %cst_7 {dimension_numbers = #tpu.dot_dimension_numbers<[1], [0], [0], [1], [0, 0, 1, 1], [], []>} : vector<8x64xf32>, vector<64x256xf32>, vector<8x256xf32> -> vector<8x256xf32>
    %c0_8 = arith.constant 0 : index
    %c0_9 = arith.constant 0 : index
    %33 = vector.load %arg5[%c0_8, %c0_9] : memref<8x1xf32, #tpu.memory_space<vmem>>, vector<8x1xf32>
    %34 = vector.broadcast %33 : vector<8x1xf32> to vector<8x256xf32>
    %35 = arith.addf %32, %34 : vector<8x256xf32>
    %c0_10 = arith.constant 0 : index
    %c0_11 = arith.constant 0 : index
    %36 = vector.load %arg6[%c0_10, %c0_11] : memref<8x256xf32, #tpu.memory_space<vmem>>, vector<8x256xf32>
    tpu.vector_store %arg6[%c0_10, %c0_11], %35 {strides = array<i32>} : memref<8x256xf32, #tpu.memory_space<vmem>>, vector<8x256xf32>,
    return
  }
  func.func @transform_0(%arg0: i32) -> (i32, i32) {
    %c0_i32 = arith.constant 0 : i32
    %c0_i32_0 = arith.constant 0 : i32
    return %c0_i32, %arg0 : i32, i32
  }
  func.func @transform_1(%arg0: i32) -> (i32, i32) {
    %c0_i32 = arith.constant 0 : i32
    %c0_i32_0 = arith.constant 0 : i32
    %c0_i32_1 = arith.constant 0 : i32
    return %c0_i32, %c0_i32_0 : i32, i32
  }
  func.func @transform_2(%arg0: i32) -> (i32, i32) {
    %c0_i32 = arith.constant 0 : i32
    %c0_i32_0 = arith.constant 0 : i32
    %c0_i32_1 = arith.constant 0 : i32
    return %c0_i32, %c0_i32_0 : i32, i32
  }
  func.func @transform_3(%arg0: i32) -> (i32, i32) {
    %c0_i32 = arith.constant 0 : i32
    %c0_i32_0 = arith.constant 0 : i32
    %c0_i32_1 = arith.constant 0 : i32
    return %c0_i32, %c0_i32_0 : i32, i32
  }
  func.func @transform_4(%arg0: i32) -> (i32, i32) {
    %c0_i32 = arith.constant 0 : i32
    %c0_i32_0 = arith.constant 0 : i32
    %c0_i32_1 = arith.constant 0 : i32
    return %c0_i32, %c0_i32_0 : i32, i32
  }
  func.func @transform_5(%arg0: i32) -> (i32, i32) {
    %c0_i32 = arith.constant 0 : i32
    %c0_i32_0 = arith.constant 0 : i32
    return %c0_i32, %arg0 : i32, i32
  }
}

</mosaic_0001>

<llo_original>
// kernel: qnet_forward.1
$region0: #{qnet_forward.1}
  #allocation0 [shape = 'u32[]', space=smem, size = 0x4, offset = 0x4, fixed_abs, tag = 'smem constant byte address 0x4 - core index']
  #allocation1 [shape = 'u32[144,128]{1,0:T(1,128)}', space=vmem, size = 0x12000, scoped, tag = 'internal scratch']
  %s0 = inlined_call_operand.vmem [shape: f32[4,256], index: 0, kind: input, shape index: {}]
  %s1 = inlined_call_operand.vmem [shape: f32[64,4], index: 1, kind: input, shape index: {}]
  %s2 = inlined_call_operand.vmem [shape: f32[64,1], index: 2, kind: input, shape index: {}]
  %s3 = inlined_call_operand.vmem [shape: f32[8,64], index: 3, kind: input, shape index: {}]
  %s4 = inlined_call_operand.vmem [shape: f32[8,1], index: 4, kind: input, shape index: {}]
  %s5 = inlined_call_operand.vmem [shape: f32[8,256], index: 5, kind: output, shape index: {}]
  %s6 = sld [smem:[#allocation0]]
  $region30: #{qnet_forward.1} parent=0
    _
  %s8 = ssub.s32 1, %s6
  %s9 = scalar_select 0, %s8, %s6
  // Predicated region
  $region2: #{qnet_forward.1} parent=0 // pred_check
    _
  $region3: #{qnet_forward.1} parent=0 // pred_check_branch
    %11 = sbr.rel (0) target = $region5
  $region4: #{qnet_forward.1} parent=0 // pred_region
    _
  $region5: #{qnet_forward.1} parent=0 // pred_fallthru
    _
  // Predicated region
  $region6: #{qnet_forward.1} parent=0 // pred_check
    _
  $region7: #{qnet_forward.1} parent=0 // pred_check_branch
    %13 = sbr.rel (0) target = $region9
  $region8: #{qnet_forward.1} parent=0 // pred_region
    _
  $region9: #{qnet_forward.1} parent=0 // pred_fallthru
    _
  // Predicated region
  $region10: #{qnet_forward.1} parent=0 // pred_check
    _
  $region11: #{qnet_forward.1} parent=0 // pred_check_branch
    %15 = sbr.rel (0) target = $region13
  $region12: #{qnet_forward.1} parent=0 // pred_region
    _
  $region13: #{qnet_forward.1} parent=0 // pred_fallthru
    _
  // Predicated region
  $region14: #{qnet_forward.1} parent=0 // pred_check
    _
  $region15: #{qnet_forward.1} parent=0 // pred_check_branch
    %17 = sbr.rel (0) target = $region17
  $region16: #{qnet_forward.1} parent=0 // pred_region
    _
  $region17: #{qnet_forward.1} parent=0 // pred_fallthru
    _
  // Predicated region
  $region18: #{qnet_forward.1} parent=0 // pred_check
    _
  $region19: #{qnet_forward.1} parent=0 // pred_check_branch
    %19 = sbr.rel (0) target = $region21
  $region20: #{qnet_forward.1} parent=0 // pred_region
    _
  $region21: #{qnet_forward.1} parent=0 // pred_fallthru
    _
  %v20 = vld [vmem:[%s0] sm:$0xff]
  %v21 = vld [vmem:[%s1] sm:$0xff]
  %v22 = vld [vmem:[%s1 + $0x8] sm:$0xff]
  %v23 = vld [vmem:[%s1 + $0x10] sm:$0xff]
  %v24 = vld [vmem:[%s1 + $0x18] sm:$0xff]
  %v25 = vld [vmem:[%s1 + $0x20] sm:$0xff]
  %v26 = vld [vmem:[%s1 + $0x28] sm:$0xff]
  %v27 = vld [vmem:[%s1 + $0x30] sm:$0xff]
  %v28 = vld [vmem:[%s1 + $0x38] sm:$0xff]
  %v29 = vld [vmem:[%s2] sm:$0xff]
  %v30 = vld [vmem:[%s2 + $0x8] sm:$0xff]
  %v31 = vld [vmem:[%s2 + $0x10] sm:$0xff]
  %v32 = vld [vmem:[%s2 + $0x18] sm:$0xff]
  %v33 = vld [vmem:[%s2 + $0x20] sm:$0xff]
  %v34 = vld [vmem:[%s2 + $0x28] sm:$0xff]
  %v35 = vld [vmem:[%s2 + $0x30] sm:$0xff]
  %v36 = vld [vmem:[%s2 + $0x38] sm:$0xff]
  %38 = vset.pattern.permute.xlu0 0
  %39 = vperm.xlu0 %38, %v29
  %v40 = vpop.permute.xlu0 %39
  %43 = vset.pattern.permute.xlu0 0
  %44 = vperm.xlu0 %43, %v30
  %v45 = vpop.permute.xlu0 %44
  %48 = vset.pattern.permute.xlu0 0
  %49 = vperm.xlu0 %48, %v31
  %v50 = vpop.permute.xlu0 %49
  %53 = vset.pattern.permute.xlu0 0
  %54 = vperm.xlu0 %53, %v32
  %v55 = vpop.permute.xlu0 %54
  %58 = vset.pattern.permute.xlu0 0
  %59 = vperm.xlu0 %58, %v33
  %v60 = vpop.permute.xlu0 %59
  %63 = vset.pattern.permute.xlu0 0
  %64 = vperm.xlu0 %63, %v34
  %v65 = vpop.permute.xlu0 %64
  %68 = vset.pattern.permute.xlu0 0
  %69 = vperm.xlu0 %68, %v35
  %v70 = vpop.permute.xlu0 %69
  %73 = vset.pattern.permute.xlu0 0
  %74 = vperm.xlu0 %73, %v36
  %v75 = vpop.permute.xlu0 %74
  %78 = vset.pattern.permute.xlu0 0
  %79 = vperm.xlu0 %78, %v21
  %v80 = vpop.permute.xlu0 %79
  %83 = vset.pattern.permute.xlu0 0
  %84 = vperm.xlu0 %83, %v22
  %v85 = vpop.permute.xlu0 %84
  %88 = vset.pattern.permute.xlu0 0
  %89 = vperm.xlu0 %88, %v23
  %v90 = vpop.permute.xlu0 %89
  %93 = vset.pattern.permute.xlu0 0
  %94 = vperm.xlu0 %93, %v24
  %v95 = vpop.permute.xlu0 %94
  %98 = vset.pattern.permute.xlu0 0
  %99 = vperm.xlu0 %98, %v25
  %v100 = vpop.permute.xlu0 %99
  %103 = vset.pattern.permute.xlu0 0
  %104 = vperm.xlu0 %103, %v26
  %v105 = vpop.permute.xlu0 %104
  %108 = vset.pattern.permute.xlu0 0
  %109 = vperm.xlu0 %108, %v27
  %v110 = vpop.permute.xlu0 %109
  %113 = vset.pattern.permute.xlu0 0
  %114 = vperm.xlu0 %113, %v28
  %v115 = vpop.permute.xlu0 %114
  %v118 = vlaneseq
  %v119 = vshrl.u32 %v118, 7
  %v120 = vsub.s32 0, %v119
  %v121 = vrot.slane %v20, %v120
  %v122 = vlaneseq
  %v123 = vshrl.u32 %v122, 7
  %v124 = vsub.s32 4, %v123
  %v125 = vrot.slane %v20, %v124
  %v128 = vlaneseq
  %v129 = vshrl.u32 %v128, 7
  %v130 = vsub.s32 0, %v129
  %v131 = vrot.slane %v121, %v130
  %v132 = vlaneseq
  %v133 = vshrl.u32 %v132, 7
  %v134 = vsub.s32 0, %v133
  %v135 = vrot.slane %v125, %v134
  %v136 = vmul.f32 %v80, %v131
  %v137 = vmul.f32 %v80, %v135
  %v138 = vmul.f32 %v85, %v131
  %v139 = vmul.f32 %v85, %v135
  %v140 = vmul.f32 %v90, %v131
  %v141 = vmul.f32 %v90, %v135
  %v142 = vmul.f32 %v95, %v131
  %v143 = vmul.f32 %v95, %v135
  %v144 = vmul.f32 %v100, %v131
  %v145 = vmul.f32 %v100, %v135
  %v146 = vmul.f32 %v105, %v131
  %v147 = vmul.f32 %v105, %v135
  %v148 = vmul.f32 %v110, %v131
  %v149 = vmul.f32 %v110, %v135
  %v150 = vmul.f32 %v115, %v131
  %v151 = vmul.f32 %v115, %v135
  %v152 = vadd.f32 %v40, %v136
  %v153 = vadd.f32 %v40, %v137
  %v154 = vadd.f32 %v45, %v138
  %v155 = vadd.f32 %v45, %v139
  %v156 = vadd.f32 %v50, %v140
  %v157 = vadd.f32 %v50, %v141
  %v158 = vadd.f32 %v55, %v142
  %v159 = vadd.f32 %v55, %v143
  %v160 = vadd.f32 %v60, %v144
  %v161 = vadd.f32 %v60, %v145
  %v162 = vadd.f32 %v65, %v146
  %v163 = vadd.f32 %v65, %v147
  %v164 = vadd.f32 %v70, %v148
  %v165 = vadd.f32 %v70, %v149
  %v166 = vadd.f32 %v75, %v150
  %v167 = vadd.f32 %v75, %v151
  %168 = vset.pattern.permute.xlu0 1
  %169 = vperm.xlu0 %168, %v21
  %v170 = vpop.permute.xlu0 %169
  %172 = vset.pattern.permute.xlu0 1
  %173 = vperm.xlu0 %172, %v22
  %v174 = vpop.permute.xlu0 %173
  %176 = vset.pattern.permute.xlu0 1
  %177 = vperm.xlu0 %176, %v23
  %v178 = vpop.permute.xlu0 %177
  %180 = vset.pattern.permute.xlu0 1
  %181 = vperm.xlu0 %180, %v24
  %v182 = vpop.permute.xlu0 %181
  %184 = vset.pattern.permute.xlu0 1
  %185 = vperm.xlu0 %184, %v25
  %v186 = vpop.permute.xlu0 %185
  %188 = vset.pattern.permute.xlu0 1
  %189 = vperm.xlu0 %188, %v26
  %v190 = vpop.permute.xlu0 %189
  %192 = vset.pattern.permute.xlu0 1
  %193 = vperm.xlu0 %192, %v27
  %v194 = vpop.permute.xlu0 %193
  %196 = vset.pattern.permute.xlu0 1
  %197 = vperm.xlu0 %196, %v28
  %v198 = vpop.permute.xlu0 %197
  %v200 = vlaneseq
  %v201 = vshrl.u32 %v200, 7
  %v202 = vsub.s32 1, %v201
  %v203 = vrot.slane %v20, %v202
  %v204 = vlaneseq
  %v205 = vshrl.u32 %v204, 7
  %v206 = vsub.s32 5, %v205
  %v207 = vrot.slane %v20, %v206
  %v210 = vlaneseq
  %v211 = vshrl.u32 %v210, 7
  %v212 = vsub.s32 1, %v211
  %v213 = vrot.slane %v203, %v212
  %v214 = vlaneseq
  %v215 = vshrl.u32 %v214, 7
  %v216 = vsub.s32 1, %v215
  %v217 = vrot.slane %v207, %v216
  %v218 = vmul.f32 %v170, %v213
  %v219 = vmul.f32 %v170, %v217
  %v220 = vmul.f32 %v174, %v213
  %v221 = vmul.f32 %v174, %v217
  %v222 = vmul.f32 %v178, %v213
  %v223 = vmul.f32 %v178, %v217
  %v224 = vmul.f32 %v182, %v213
  %v225 = vmul.f32 %v182, %v217
  %v226 = vmul.f32 %v186, %v213
  %v227 = vmul.f32 %v186, %v217
  %v228 = vmul.f32 %v190, %v213
  %v229 = vmul.f32 %v190, %v217
  %v230 = vmul.f32 %v194, %v213
  %v231 = vmul.f32 %v194, %v217
  %v232 = vmul.f32 %v198, %v213
  %v233 = vmul.f32 %v198, %v217
  %v234 = vadd.f32 %v152, %v218
  %v235 = vadd.f32 %v153, %v219
  %v236 = vadd.f32 %v154, %v220
  %v237 = vadd.f32 %v155, %v221
  %v238 = vadd.f32 %v156, %v222
  %v239 = vadd.f32 %v157, %v223
  %v240 = vadd.f32 %v158, %v224
  %v241 = vadd.f32 %v159, %v225
  %v242 = vadd.f32 %v160, %v226
  %v243 = vadd.f32 %v161, %v227
  %v244 = vadd.f32 %v162, %v228
  %v245 = vadd.f32 %v163, %v229
  %v246 = vadd.f32 %v164, %v230
  %v247 = vadd.f32 %v165, %v231
  %v248 = vadd.f32 %v166, %v232
  %v249 = vadd.f32 %v167, %v233
  %250 = vset.pattern.permute.xlu0 2
  %251 = vperm.xlu0 %250, %v21
  %v252 = vpop.permute.xlu0 %251
  %254 = vset.pattern.permute.xlu0 2
  %255 = vperm.xlu0 %254, %v22
  %v256 = vpop.permute.xlu0 %255
  %258 = vset.pattern.permute.xlu0 2
  %259 = vperm.xlu0 %258, %v23
  %v260 = vpop.permute.xlu0 %259
  %262 = vset.pattern.permute.xlu0 2
  %263 = vperm.xlu0 %262, %v24
  %v264 = vpop.permute.xlu0 %263
  %266 = vset.pattern.permute.xlu0 2
  %267 = vperm.xlu0 %266, %v25
  %v268 = vpop.permute.xlu0 %267
  %270 = vset.pattern.permute.xlu0 2
  %271 = vperm.xlu0 %270, %v26
  %v272 = vpop.permute.xlu0 %271
  %274 = vset.pattern.permute.xlu0 2
  %275 = vperm.xlu0 %274, %v27
  %v276 = vpop.permute.xlu0 %275
  %278 = vset.pattern.permute.xlu0 2
  %279 = vperm.xlu0 %278, %v28
  %v280 = vpop.permute.xlu0 %279
  %v282 = vlaneseq
  %v283 = vshrl.u32 %v282, 7
  %v284 = vsub.s32 2, %v283
  %v285 = vrot.slane %v20, %v284
  %v286 = vlaneseq
  %v287 = vshrl.u32 %v286, 7
  %v288 = vsub.s32 6, %v287
  %v289 = vrot.slane %v20, %v288
  %v292 = vlaneseq
  %v293 = vshrl.u32 %v292, 7
  %v294 = vsub.s32 2, %v293
  %v295 = vrot.slane %v285, %v294
  %v296 = vlaneseq
  %v297 = vshrl.u32 %v296, 7
  %v298 = vsub.s32 2, %v297
  %v299 = vrot.slane %v289, %v298
  %v300 = vmul.f32 %v252, %v295
  %v301 = vmul.f32 %v252, %v299
  %v302 = vmul.f32 %v256, %v295
  %v303 = vmul.f32 %v256, %v299
  %v304 = vmul.f32 %v260, %v295
  %v305 = vmul.f32 %v260, %v299
  %v306 = vmul.f32 %v264, %v295
  %v307 = vmul.f32 %v264, %v299
  %v308 = vmul.f32 %v268, %v295
  %v309 = vmul.f32 %v268, %v299
  %v310 = vmul.f32 %v272, %v295
  %v311 = vmul.f32 %v272, %v299
  %v312 = vmul.f32 %v276, %v295
  %v313 = vmul.f32 %v276, %v299
  %v314 = vmul.f32 %v280, %v295
  %v315 = vmul.f32 %v280, %v299
  %v316 = vadd.f32 %v234, %v300
  %v317 = vadd.f32 %v235, %v301
  %v318 = vadd.f32 %v236, %v302
  %v319 = vadd.f32 %v237, %v303
  %v320 = vadd.f32 %v238, %v304
  %v321 = vadd.f32 %v239, %v305
  %v322 = vadd.f32 %v240, %v306
  %v323 = vadd.f32 %v241, %v307
  %v324 = vadd.f32 %v242, %v308
  %v325 = vadd.f32 %v243, %v309
  %v326 = vadd.f32 %v244, %v310
  %v327 = vadd.f32 %v245, %v311
  %v328 = vadd.f32 %v246, %v312
  %v329 = vadd.f32 %v247, %v313
  %v330 = vadd.f32 %v248, %v314
  %v331 = vadd.f32 %v249, %v315
  %332 = vset.pattern.permute.xlu0 3
  %333 = vperm.xlu0 %332, %v21
  %v334 = vpop.permute.xlu0 %333
  %336 = vset.pattern.permute.xlu0 3
  %337 = vperm.xlu0 %336, %v22
  %v338 = vpop.permute.xlu0 %337
  %340 = vset.pattern.permute.xlu0 3
  %341 = vperm.xlu0 %340, %v23
  %v342 = vpop.permute.xlu0 %341
  %344 = vset.pattern.permute.xlu0 3
  %345 = vperm.xlu0 %344, %v24
  %v346 = vpop.permute.xlu0 %345
  %348 = vset.pattern.permute.xlu0 3
  %349 = vperm.xlu0 %348, %v25
  %v350 = vpop.permute.xlu0 %349
  %352 = vset.pattern.permute.xlu0 3
  %353 = vperm.xlu0 %352, %v26
  %v354 = vpop.permute.xlu0 %353
  %356 = vset.pattern.permute.xlu0 3
  %357 = vperm.xlu0 %356, %v27
  %v358 = vpop.permute.xlu0 %357
  %360 = vset.pattern.permute.xlu0 3
  %361 = vperm.xlu0 %360, %v28
  %v362 = vpop.permute.xlu0 %361
  %v364 = vlaneseq
  %v365 = vshrl.u32 %v364, 7
  %v366 = vsub.s32 3, %v365
  %v367 = vrot.slane %v20, %v366
  %v368 = vlaneseq
  %v369 = vshrl.u32 %v368, 7
  %v370 = vsub.s32 7, %v369
  %v371 = vrot.slane %v20, %v370
  %v374 = vlaneseq
  %v375 = vshrl.u32 %v374, 7
  %v376 = vsub.s32 3, %v375
  %v377 = vrot.slane %v367, %v376
  %v378 = vlaneseq
  %v379 = vshrl.u32 %v378, 7
  %v380 = vsub.s32 3, %v379
  %v381 = vrot.slane %v371, %v380
  %v382 = vmul.f32 %v334, %v377
  %v383 = vmul.f32 %v334, %v381
  %v384 = vmul.f32 %v338, %v377
  %v385 = vmul.f32 %v338, %v381
  %v386 = vmul.f32 %v342, %v377
  %v387 = vmul.f32 %v342, %v381
  %v388 = vmul.f32 %v346, %v377
  %v389 = vmul.f32 %v346, %v381
  %v390 = vmul.f32 %v350, %v377
  %v391 = vmul.f32 %v350, %v381
  %v392 = vmul.f32 %v354, %v377
  %v393 = vmul.f32 %v354, %v381
  %v394 = vmul.f32 %v358, %v377
  %v395 = vmul.f32 %v358, %v381
  %v396 = vmul.f32 %v362, %v377
  %v397 = vmul.f32 %v362, %v381
  %v398 = vadd.f32 %v316, %v382
  %v399 = vadd.f32 %v317, %v383
  %v400 = vadd.f32 %v318, %v384
  %v401 = vadd.f32 %v319, %v385
  %v402 = vadd.f32 %v320, %v386
  %v403 = vadd.f32 %v321, %v387
  %v404 = vadd.f32 %v322, %v388
  %v405 = vadd.f32 %v323, %v389
  %v406 = vadd.f32 %v324, %v390
  %v407 = vadd.f32 %v325, %v391
  %v408 = vadd.f32 %v326, %v392
  %v409 = vadd.f32 %v327, %v393
  %v410 = vadd.f32 %v328, %v394
  %v411 = vadd.f32 %v329, %v395
  %v412 = vadd.f32 %v330, %v396
  %v413 = vadd.f32 %v331, %v397
  %v414 = vmax.f32 %v398, 0.0
  %v415 = vmax.f32 %v399, 0.0
  %v416 = vmax.f32 %v400, 0.0
  %v417 = vmax.f32 %v401, 0.0
  %v418 = vmax.f32 %v402, 0.0
  %v419 = vmax.f32 %v403, 0.0
  %v420 = vmax.f32 %v404, 0.0
  %v421 = vmax.f32 %v405, 0.0
  %v422 = vmax.f32 %v406, 0.0
  %v423 = vmax.f32 %v407, 0.0
  %v424 = vmax.f32 %v408, 0.0
  %v425 = vmax.f32 %v409, 0.0
  %v426 = vmax.f32 %v410, 0.0
  %v427 = vmax.f32 %v411, 0.0
  %v428 = vmax.f32 %v412, 0.0
  %v429 = vmax.f32 %v413, 0.0
  %v430 = vld [vmem:[%s3] sm:$0xff]
  %v431 = vld [vmem:[%s4] sm:$0xff]
  %433 = vset.pattern.permute.xlu0 0
  %434 = vperm.xlu0 %433, %v431
  %v435 = vpop.permute.xlu0 %434
  %vm437 = vcmask 523264
  %v439 = vsel %vm437, %v430, 0
  %441 = vmatprep.subr.mxu0 0.0
  %442 = vmatpush1.msra.mxu0 0.0
  %443 = vmatprep.subr.mxu0 0.0
  %444 = vmatpush1.msra.mxu0 0.0
  %445 = vmatprep.subr.mxu0 0.0
  %446 = vmatpush1.msra.mxu0 0.0
  %447 = vmatprep.subr.mxu0 0.0
  %448 = vmatpush1.msra.mxu0 0.0
  %449 = vmatprep.subr.mxu0 0.0
  %450 = vmatpush1.msra.mxu0 0.0
  %451 = vmatprep.subr.mxu0 0.0
  %452 = vmatpush1.msra.mxu0 0.0
  %453 = vmatprep.subr.mxu0 0.0
  %454 = vmatpush1.msra.mxu0 0.0
  %455 = vmatprep.subr.mxu0 0.0
  %456 = vmatpush1.msra.mxu0 0.0
  %457 = vmatprep.subr.mxu0 %v429
  %458 = vmatpush1.msra.mxu0 %v428
  %459 = vmatprep.subr.mxu0 %v427
  %460 = vmatpush1.msra.mxu0 %v426
  %461 = vmatprep.subr.mxu0 %v425
  %462 = vmatpush1.msra.mxu0 %v424
  %463 = vmatprep.subr.mxu0 %v423
  %464 = vmatpush1.msra.mxu0 %v422
  %465 = vmatprep.subr.mxu0 %v421
  %466 = vmatpush1.msra.mxu0 %v420
  %467 = vmatprep.subr.mxu0 %v419
  %468 = vmatpush1.msra.mxu0 %v418
  %469 = vmatprep.subr.mxu0 %v417
  %470 = vmatpush1.msra.mxu0 %v416
  %471 = vmatprep.subr.mxu0 %v415
  %472 = vmatpush1.msra.mxu0 %v414
  %473 = vmatprep.subr.mxu0 0.0
  %474 = vmatpush2.msra.mxu0 0.0
  %475 = vmatprep.subr.mxu0 0.0
  %476 = vmatpush2.msra.mxu0 0.0
  %477 = vmatprep.subr.mxu0 0.0
  %478 = vmatpush2.msra.mxu0 0.0
  %479 = vmatprep.subr.mxu0 0.0
  %480 = vmatpush2.msra.mxu0 0.0
  %481 = vmatprep.subr.mxu0 0.0
  %482 = vmatpush2.msra.mxu0 0.0
  %483 = vmatprep.subr.mxu0 0.0
  %484 = vmatpush2.msra.mxu0 0.0
  %485 = vmatprep.subr.mxu0 0.0
  %486 = vmatpush2.msra.mxu0 0.0
  %487 = vmatprep.subr.mxu0 0.0
  %488 = vmatpush2.msra.mxu0 0.0
  %489 = vmatprep.subr.mxu0 0.0
  %490 = vmatpush2.msra.mxu0 0.0
  %491 = vmatprep.subr.mxu0 0.0
  %492 = vmatpush2.msra.mxu0 0.0
  %493 = vmatprep.subr.mxu0 0.0
  %494 = vmatpush2.msra.mxu0 0.0
  %495 = vmatprep.subr.mxu0 0.0
  %496 = vmatpush2.msra.mxu0 0.0
  %497 = vmatprep.subr.mxu0 0.0
  %498 = vmatpush2.msra.mxu0 0.0
  %499 = vmatprep.subr.mxu0 0.0
  %500 = vmatpush2.msra.mxu0 0.0
  %501 = vmatprep.subr.mxu0 0.0
  %502 = vmatpush2.msra.mxu0 0.0
  %503 = vmatprep.subr.mxu0 0.0
  %504 = vmatpush2.msra.mxu0 0.0
  %505 = vmatprep.mubr.f32.mxu0 0.0
  %506 = vmatmul.mubr.f32.gmra.mxu0 %v439
  %v507 = vpop.f32.mrf.mxu0
  %v508 = vadd.f32 %v435, %v507
  %v509 = vpop.f32.mrf.mxu0
  %v510 = vadd.f32 %v435, %v509
  %511 = vdwg.mxu0
  %512 = vst [vmem:[%s5] sm:$0xff] %v508
  %513 = vst [vmem:[%s5 + $0x8] sm:$0xff] %v510
  // Predicated region
  $region22: #{qnet_forward.1} parent=0 // pred_check
    _
  $region23: #{qnet_forward.1} parent=0 // pred_check_branch
    %515 = sbr.rel (0) target = $region25
  $region24: #{qnet_forward.1} parent=0 // pred_region
    _
  $region25: #{qnet_forward.1} parent=0 // pred_fallthru
    _
  // Predicated region
  $region26: #{qnet_forward.1} parent=0 // pred_check
    _
  $region27: #{qnet_forward.1} parent=0 // pred_check_branch
    %517 = sbr.rel (0) target = $region29
  $region28: #{qnet_forward.1} parent=0 // pred_region
    _
  $region29: #{qnet_forward.1} parent=0 // pred_fallthru
    _

</llo_original>
